<compile_context>
chip_gen: v7x
topology: tpu7x:2x2x1
jax: 0.10.0
libtpu: 0.0.40
codegen_flags: <defaults>
</compile_context>

<pallas_src>
import jax
import jax.numpy as jnp
from jax.experimental import pallas as pl
from jax.experimental.pallas import tpu as pltpu


def _asr_kernel(lens_ref, x_ref, w_ref, b_ref, o_ref):
    # lens_ref: SMEM (B,) int32            (scalar prefetch)
    # x_ref:    VMEM (1, tT, D_in) f32     block for (batch b, time-tile q)
    # w_ref:    VMEM (D_in, D_out) bf16    resident, single-buffered
    # b_ref:    VMEM (1, D_out)    f32     resident, single-buffered
    # o_ref:    VMEM (1, tT, D_out) bf16 (or f32 via out_dtype)
    b = pl.program_id(0)
    q = pl.program_id(1)
    tT = o_ref.shape[1]

    # Cast f32 activations to bf16 on the VPU (free slot in this mem-bound
    # regime) instead of a separate wrapper-side XLA cast pass over x.
    x = x_ref[0].astype(jnp.bfloat16)                       # (tT, D_in)
    w = w_ref[...]                                          # (D_in, D_out)
    # MXU matmul: bf16 operands, f32 accumulation.
    y = jnp.dot(x, w, preferred_element_type=jnp.float32)   # (tT, D_out) f32
    y = y + b_ref[...]                                      # (1, D_out) bcast

    # Length mask: (tT, 1) time-only iota with the *global* time offset,
    # broadcast across lanes by the select.  Also neutralizes any overhang
    # rows of a partial last time block (t_global >= T >= lens[b]).
    t_local = jax.lax.broadcasted_iota(jnp.int32, (tT, 1), 0)
    t_global = q * tT + t_local
    valid = t_global < lens_ref[b]                          # (tT, 1) bool
    o_ref[0] = jnp.where(valid, y, 0.0).astype(o_ref.dtype)


def prepare_params(weight, bias):
    """Pack PyTorch nn.Linear params once (transpose + bf16 cast).

    Hoisted out of the per-call path so streaming / per-utterance inference
    does not re-transpose/cast on every forward.
    weight: (D_out, D_in) -> (D_in, D_out) bf16;  bias: (D_out,) -> (1, D_out) f32.
    """
    w_packed = jnp.asarray(weight).T.astype(jnp.bfloat16)
    b_packed = jnp.asarray(bias).astype(jnp.float32).reshape(1, -1)
    return w_packed, b_packed


def asr_forward(x, x_lengths, w_packed, b_packed, *, time_tile=1024,
                out_dtype=jnp.bfloat16):
    """x: (B, T, D_in) f32; x_lengths: (B,) int; w_packed: (D_in, D_out) bf16;
    b_packed: (1, D_out) f32.  Returns (B, T, D_out) `out_dtype` with frames
    t >= x_lengths[b] zeroed."""
    B, T, D_in = x.shape
    D_out = w_packed.shape[1]

    # Fixed time tile: multiple of 16 (bf16 sublane packing); partial last
    # block handled by pl.cdiv + the in-kernel mask, no divisor hunting.
    time_tile = max(16, (int(time_tile) // 16) * 16)
    tT = T if T <= time_tile else time_tile

    grid = (B, pl.cdiv(T, tT))
    grid_spec = pltpu.PrefetchScalarGridSpec(
        num_scalar_prefetch=1,
        grid=grid,
        in_specs=[
            pl.BlockSpec((1, tT, D_in), lambda b, q, lens: (b, q, 0)),
            # Constant-index weight/bias: single buffer (default double buffer
            # is pure VMEM waste for revisited blocks).
            pl.BlockSpec((D_in, D_out), lambda b, q, lens: (0, 0),
                         pipeline_mode=pl.Buffered(buffer_count=1)),
            pl.BlockSpec((1, D_out), lambda b, q, lens: (0, 0),
                         pipeline_mode=pl.Buffered(buffer_count=1)),
        ],
        out_specs=pl.BlockSpec((1, tT, D_out), lambda b, q, lens: (b, q, 0)),
    )

    # Explicit VMEM budget (re-derived per call): 2x x-block + 2x out-block +
    # resident weight/bias + slack.  Clamped to 64 MiB so the same tiling is
    # safe on v7x (64 MiB physical) as well as v5e/v6e.
    out_itemsize = jnp.dtype(out_dtype).itemsize
    x_blk = tT * D_in * x.dtype.itemsize
    o_blk = tT * D_out * out_itemsize
    need = 2 * x_blk + 2 * o_blk + D_in * D_out * 2 + D_out * 4 + (1 << 20)
    vmem_limit = int(min(max(2 * need, 8 << 20), 64 << 20))

    cost = pl.CostEstimate(
        flops=2 * B * T * D_in * D_out,
        transcendentals=0,
        bytes_accessed=(x.size * x.dtype.itemsize
                        + w_packed.size * 2 + b_packed.size * 4
                        + B * T * D_out * out_itemsize),
    )

    return pl.pallas_call(
        _asr_kernel,
        out_shape=jax.ShapeDtypeStruct((B, T, D_out), out_dtype),
        grid_spec=grid_spec,
        compiler_params=pltpu.CompilerParams(
            dimension_semantics=("parallel", "parallel"),
            vmem_limit_bytes=vmem_limit),
        cost_estimate=cost,
    )(x_lengths.astype(jnp.int32), x, w_packed, b_packed)


if __name__ == "__main__":
    # Small ASR-ish shapes: batch=2, time=8, in-features=32, out-features=32.
    B, T, D_in, D_out = 2, 8, 32, 32

    key = jax.random.PRNGKey(0)
    k_x, k_w = jax.random.split(key, 2)

    x = jax.random.normal(k_x, (B, T, D_in), dtype=jnp.float32)
    x_lengths = jnp.array([8, 5], dtype=jnp.int32)

    # Deterministic params per _init_weights: Linear weight ~ N(0, 0.02), bias 0.
    weight = 0.02 * jax.random.normal(k_w, (D_out, D_in), dtype=jnp.float32)
    bias = jnp.zeros((D_out,), dtype=jnp.float32)

    # Pack params once (outside the per-call path).
    w_packed, b_packed = prepare_params(weight, bias)

    out = asr_forward(x, x_lengths, w_packed, b_packed)
    out = jax.block_until_ready(out)

    # Reference check (plain f32 JAX).  The kernel uses bf16 MXU operands with
    # f32 accumulation and a bf16 output, so compare with bf16 tolerance.
    ref = jnp.einsum("btd,od->bto", x, weight) + bias
    mask = jnp.arange(T)[None, :, None] < x_lengths[:, None, None]
    ref = jnp.where(mask, ref, 0.0)
    assert out.shape == (B, T, D_out)
    assert out.dtype == jnp.bfloat16
    assert jnp.allclose(out.astype(jnp.float32), ref, atol=2e-2, rtol=2e-2)

    print("KERNEL_OK")
</pallas_src>

<mosaic_0001>
module attributes {stable_mosaic.version = 11 : i64} {
  func.func @_asr_kernel(%arg0: i32, %arg1: i32, %arg2: memref<2xi32, #tpu.memory_space<smem>>, %arg3: memref<1x8x32xf32, #tpu.memory_space<vmem>>, %arg4: memref<32x32xbf16, #tpu.memory_space<vmem>>, %arg5: memref<1x32xf32, #tpu.memory_space<vmem>>, %arg6: memref<1x8x32xbf16, #tpu.memory_space<vmem>>) attributes {dimension_semantics = [#tpu.dimension_semantics<parallel>, #tpu.dimension_semantics<parallel>], iteration_bounds = array<i64: 2, 1>, scalar_prefetch = 1 : i64, scratch_operands = 0 : i64, tpu.core_type = #tpu.core_type<tc>, window_params = [{transform_indices = @transform_0, window_bounds = array<i64: 1, 8, 32>}, {pipeline_mode = #tpu.pipeline_mode<synchronous>, transform_indices = @transform_1, window_bounds = array<i64: 32, 32>}, {pipeline_mode = #tpu.pipeline_mode<synchronous>, transform_indices = @transform_2, window_bounds = array<i64: 1, 32>}, {transform_indices = @transform_3, window_bounds = array<i64: 1, 8, 32>}]} {
    %c0 = arith.constant 0 : index
    %c0_0 = arith.constant 0 : index
    %c0_1 = arith.constant 0 : index
    %0 = vector.load %arg3[%c0, %c0_0, %c0_1] : memref<1x8x32xf32, #tpu.memory_space<vmem>>, vector<1x8x32xf32>
    %1 = vector.shape_cast %0 : vector<1x8x32xf32> to vector<8x32xf32>
    %2 = arith.truncf %1 : vector<8x32xf32> to vector<8x32xbf16>
    %c0_2 = arith.constant 0 : index
    %c0_3 = arith.constant 0 : index
    %3 = vector.load %arg4[%c0_2, %c0_3] : memref<32x32xbf16, #tpu.memory_space<vmem>>, vector<32x32xbf16>
    %cst = arith.constant dense<0.000000e+00> : vector<8x32xf32>
    %4 = tpu.matmul %2, %3, %cst {dimension_numbers = #tpu.dot_dimension_numbers<[1], [0], [0], [1], [0, 0, 1, 1], [], []>} : vector<8x32xbf16>, vector<32x32xbf16>, vector<8x32xf32> -> vector<8x32xf32>
    %c0_4 = arith.constant 0 : index
    %c0_5 = arith.constant 0 : index
    %5 = vector.load %arg5[%c0_4, %c0_5] : memref<1x32xf32, #tpu.memory_space<vmem>>, vector<1x32xf32>
    %6 = vector.broadcast %5 : vector<1x32xf32> to vector<8x32xf32>
    %7 = arith.addf %4, %6 : vector<8x32xf32>
    %8 = tpu.iota {dimensions = array<i32: 0>} : vector<8x1xi32>
    %c8_i32 = arith.constant 8 : i32
    %9 = arith.muli %arg1, %c8_i32 : i32
    %10 = vector.broadcast %9 : i32 to vector<8x1xi32>
    %11 = arith.addi %10, %8 : vector<8x1xi32>
    %12 = arith.index_cast %arg0 : i32 to index
    %13 = memref.load %arg2[%12] : memref<2xi32, #tpu.memory_space<smem>>
    %14 = vector.broadcast %13 : i32 to vector<8x1xi32>
    %15 = arith.cmpi slt, %11, %14 : vector<8x1xi32>
    %cst_6 = arith.constant 0.000000e+00 : f32
    %16 = vector.shape_cast %15 : vector<8x1xi1> to vector<8x1xi1>
    %17 = vector.broadcast %16 : vector<8x1xi1> to vector<8x32xi1>
    %18 = vector.broadcast %cst_6 : f32 to vector<8x32xf32>
    %19 = arith.select %17, %7, %18 : vector<8x32xi1>, vector<8x32xf32>
    %20 = arith.truncf %19 : vector<8x32xf32> to vector<8x32xbf16>
    %c0_7 = arith.constant 0 : index
    %c0_8 = arith.constant 0 : index
    %c0_9 = arith.constant 0 : index
    %21 = vector.load %arg6[%c0_7, %c0_8, %c0_9] : memref<1x8x32xbf16, #tpu.memory_space<vmem>>, vector<1x8x32xbf16>
    %22 = vector.shape_cast %21 : vector<1x8x32xbf16> to vector<8x32xbf16>
    %23 = vector.shape_cast %20 : vector<8x32xbf16> to vector<1x8x32xbf16>
    tpu.vector_store %arg6[%c0_7, %c0_8, %c0_9], %23 {strides = array<i32>} : memref<1x8x32xbf16, #tpu.memory_space<vmem>>, vector<1x8x32xbf16>,
    return
  }
  func.func @transform_0(%arg0: i32, %arg1: i32, %arg2: memref<2xi32, #tpu.memory_space<smem>>) -> (i32, i32, i32) {
    %c0_i32 = arith.constant 0 : i32
    %c0_i32_0 = arith.constant 0 : i32
    return %arg0, %arg1, %c0_i32 : i32, i32, i32
  }
  func.func @transform_1(%arg0: i32, %arg1: i32, %arg2: memref<2xi32, #tpu.memory_space<smem>>) -> (i32, i32) {
    %c0_i32 = arith.constant 0 : i32
    %c0_i32_0 = arith.constant 0 : i32
    %c0_i32_1 = arith.constant 0 : i32
    return %c0_i32, %c0_i32_0 : i32, i32
  }
  func.func @transform_2(%arg0: i32, %arg1: i32, %arg2: memref<2xi32, #tpu.memory_space<smem>>) -> (i32, i32) {
    %c0_i32 = arith.constant 0 : i32
    %c0_i32_0 = arith.constant 0 : i32
    %c0_i32_1 = arith.constant 0 : i32
    return %c0_i32, %c0_i32_0 : i32, i32
  }
  func.func @transform_3(%arg0: i32, %arg1: i32, %arg2: memref<2xi32, #tpu.memory_space<smem>>) -> (i32, i32, i32) {
    %c0_i32 = arith.constant 0 : i32
    %c0_i32_0 = arith.constant 0 : i32
    return %arg0, %arg1, %c0_i32 : i32, i32, i32
  }
}

</mosaic_0001>

<llo_original>
// kernel: tpu_custom_call.1
$region0: #{tpu_custom_call.1}
  #allocation0 [shape = 'u32[]', space=smem, size = 0x4, offset = 0x4, fixed_abs, tag = 'smem constant byte address 0x4 - core index']
  #allocation1 [shape = 'u32[144,128]{1,0:T(1,128)}', space=vmem, size = 0x12000, scoped, tag = 'internal scratch']
  #allocation2 [shape = 's32[1]{0}', space=sflag, size = 0x4, scoped, tag = 'scoped memory for tpu_custom_call.1']
  #allocation3 [shape = 'u8[512]{0}', space=smem, size = 0x200, scoped, tag = 'prefetched SMEM operand 0']
  %s0 = inlined_call_operand.hbm [shape: s32[2], index: 0, kind: input, shape index: {}]
  %s1 = inlined_call_operand.hbm [shape: f32[2,8,32], index: 1, kind: input, shape index: {}]
  %s2 = inlined_call_operand.hbm [shape: bf16[32,32], index: 2, kind: input, shape index: {}]
  %s3 = inlined_call_operand.vmem [shape: f32[1,32], index: 3, kind: input, shape index: {}]
  %s4 = inlined_call_operand.hbm [shape: bf16[2,8,32], index: 4, kind: output, shape index: {}]
  %s5 = sld [smem:[#allocation0]]
  $region53: #{tpu_custom_call.1} parent=0
    _
  %s7 = ssub.s32 1, %s5
  %s8 = scalar_select 0, %s7, %s5
  %10 = dma.hbm_to_smem %s0, 16, [#allocation3], [#allocation2]
  %11 = dma.done [#allocation2], 16
  %12 = sfence
  $region1: #{tpu_custom_call.1} parent=0
    #allocation4 [shape = 'u8[8192]{0}', space=vmem, size = 0x2000, scoped, tag = 'input window, operand 1']
    #allocation5 [shape = 's32[2]{0}', space=sflag, size = 0x8, scoped, tag = 'scoped memory for tpu_custom_call.1']
    #allocation6 [shape = 's32[2]{0}', space=sflag, size = 0x8, scoped, tag = 'scoped memory for tpu_custom_call.1']
    #allocation7 [shape = 'u8[8192]{0}', space=vmem, size = 0x2000, scoped, tag = 'input window, operand 2, single buffered']
    #allocation8 [shape = 's32[1]{0}', space=sflag, size = 0x4, scoped, tag = 'scoped memory for tpu_custom_call.1']
    #allocation9 [shape = 'u8[4096]{0}', space=vmem, size = 0x1000, scoped, tag = 'output window, operand 0']
    %13 = vsyncpa [#allocation5], 0
    %s14 = scalar_lea.sflag [#allocation5], 1
    %15 = vsyncpa %s14, 0
    %16 = vsyncpa [#allocation8], 0
    %17 = vsyncpa [#allocation6], 0
    %s18 = scalar_lea.sflag [#allocation6], 1
    %19 = vsyncpa %s18, 0
    loop: start=0, step=1, limit=4
    $region2: #{tpu_custom_call.1} parent=1 // loop_pre_header
      _
    $region3: #{tpu_custom_call.1} parent=1 // loop_header
      %s21 = sphi 0, %s25
      %p22 = scmp.ge.s32.totalorder %s21, 4
      %s28 = sphi 0, %s40
      %s29 = sphi 0, %s36
      %s30 = sphi 0, %s28
      %s31 = sphi 0, %s29
      %s32 = sphi 0, %s30
      %s33 = sphi 0, %s31
      %s45 = sphi 0, %s47
      %s48 = sphi 0, %s45
      %s49 = sphi 0, %s48
      %s65 = sphi 0, %s49
      %s69 = sphi 0, %s69
      %s71 = sphi 0, %s69
      %s72 = sphi 0, %s71
      %s86 = sphi 0, %s72
      %s90 = sphi 0, %s90
      %s92 = sphi 0, %s90
      %s93 = sphi 0, %s92
      %s107 = sphi 0, %s93
      %s115 = sphi 0, %s117
      %s118 = sphi 0, %s115
      %s119 = sphi 0, %s118
      %s135 = sphi 0, %s119
    $region4: #{tpu_custom_call.1} parent=1 // loop_header_branch
      %24 = sbr.rel (%p22) target = $region8
    $region5: #{tpu_custom_call.1} parent=1 // loop_body
      %s26 = ssub.s32 %s21, 1
      %s27 = ssub.s32 %s21, 2
      %s34 = sadd.s32 1, %s29
      %p35 = scmp.ge.s32.totalorder %s34, 1
      %s36 = scalar_select %p35, 0, %s34
      %s37 = sadd.s32 1, %s28
      %s38 = scalar_select %p35, %s37, %s28
      %p39 = scmp.ge.s32.totalorder %s38, 2
      %s40 = scalar_select %p39, 0, %s38
      %s41 = ssub.s32 %s28, %s40
      %s42 = ssub.s32 %s29, %s36
      %s43 = sor.u32 %s41, %s42
      %p44 = scmp.eq.s32.totalorder %s43, 0
      %s46 = sadd.s32 %s45, 1
      %s47 = scalar_select %p44, %s45, %s46
      %p50 = pneg %p44
      %p51 = scmp.eq.s32.totalorder %s21, 1
      %p52 = por %p50, %p51
      %p53 = scmp.ne.s32.totalorder %s45, %s48
      %p54 = scmp.eq.s32.totalorder %s21, 0
      %p55 = por %p53, %p54
      %p56 = scmp.ne.s32.totalorder %s45, %s48
      %p57 = scmp.eq.s32.totalorder %s26, 1
      %p58 = por %p56, %p57
      %p59 = scmp.ne.s32.totalorder %s48, %s49
      %p60 = scmp.eq.s32.totalorder %s26, 0
      %p61 = por %p59, %p60
      %p62 = scmp.ne.s32.totalorder %s48, %s49
      %p63 = scmp.eq.s32.totalorder %s27, 1
      %p64 = por %p62, %p63
      %p66 = scmp.ne.s32.totalorder %s49, %s65
      %p67 = scmp.eq.s32.totalorder %s27, 0
      %p68 = por %p66, %p67
      %s70 = sadd.s32 %s69, 1
      %p73 = scmp.eq.s32.totalorder %s21, 1
      %p74 = scmp.ne.s32.totalorder %s69, %s71
      %p75 = scmp.eq.s32.totalorder %s21, 0
      %p76 = por %p74, %p75
      %p77 = scmp.ne.s32.totalorder %s69, %s71
      %p78 = scmp.eq.s32.totalorder %s26, 1
      %p79 = por %p77, %p78
      %p80 = scmp.ne.s32.totalorder %s71, %s72
      %p81 = scmp.eq.s32.totalorder %s26, 0
      %p82 = por %p80, %p81
      %p83 = scmp.ne.s32.totalorder %s71, %s72
      %p84 = scmp.eq.s32.totalorder %s27, 1
      %p85 = por %p83, %p84
      %p87 = scmp.ne.s32.totalorder %s72, %s86
      %p88 = scmp.eq.s32.totalorder %s27, 0
      %p89 = por %p87, %p88
      %s91 = sadd.s32 %s90, 1
      %p94 = scmp.eq.s32.totalorder %s21, 1
      %p95 = scmp.ne.s32.totalorder %s90, %s92
      %p96 = scmp.eq.s32.totalorder %s21, 0
      %p97 = por %p95, %p96
      %p98 = scmp.ne.s32.totalorder %s90, %s92
      %p99 = scmp.eq.s32.totalorder %s26, 1
      %p100 = por %p98, %p99
      %p101 = scmp.ne.s32.totalorder %s92, %s93
      %p102 = scmp.eq.s32.totalorder %s26, 0
      %p103 = por %p101, %p102
      %p104 = scmp.ne.s32.totalorder %s92, %s93
      %p105 = scmp.eq.s32.totalorder %s27, 1
      %p106 = por %p104, %p105
      %p108 = scmp.ne.s32.totalorder %s93, %s107
      %p109 = scmp.eq.s32.totalorder %s27, 0
      %p110 = por %p108, %p109
      %s111 = ssub.s32 %s28, %s40
      %s112 = ssub.s32 %s29, %s36
      %s113 = sor.u32 %s111, %s112
      %p114 = scmp.eq.s32.totalorder %s113, 0
      %s116 = sadd.s32 %s115, 1
      %s117 = scalar_select %p114, %s115, %s116
      %p120 = pneg %p114
      %p121 = scmp.eq.s32.totalorder %s21, 1
      %p122 = por %p120, %p121
      %p123 = scmp.ne.s32.totalorder %s115, %s118
      %p124 = scmp.eq.s32.totalorder %s21, 0
      %p125 = por %p123, %p124
      %p126 = scmp.ne.s32.totalorder %s115, %s118
      %p127 = scmp.eq.s32.totalorder %s26, 1
      %p128 = por %p126, %p127
      %p129 = scmp.ne.s32.totalorder %s118, %s119
      %p130 = scmp.eq.s32.totalorder %s26, 0
      %p131 = por %p129, %p130
      %p132 = scmp.ne.s32.totalorder %s118, %s119
      %p133 = scmp.eq.s32.totalorder %s27, 1
      %p134 = por %p132, %p133
      %p136 = scmp.ne.s32.totalorder %s119, %s135
      %p137 = scmp.eq.s32.totalorder %s27, 0
      %p138 = por %p136, %p137
      %p139 = scmp.le.s32.totalorder 1, %s21
      %p140 = scmp.lt.s32.totalorder %s21, 3
      %p141 = pnand %p139, %p140
      %p142 = pneg %p141
      // Predicated region
      $region9: #{tpu_custom_call.1} parent=5 // pred_check
        _
      $region10: #{tpu_custom_call.1} parent=5 // pred_check_branch
        %144 = sbr.rel (%p141) target = $region12
      $region11: #{tpu_custom_call.1} parent=5 // pred_region
        %s145 = ssub.s32 %s21, 1
        // Predicated region
        $region13: #{tpu_custom_call.1} parent=11 // pred_check
          %p146 = pneg %p82
        $region14: #{tpu_custom_call.1} parent=11 // pred_check_branch
          %148 = sbr.rel (%p146) target = $region16
        $region15: #{tpu_custom_call.1} parent=11 // pred_region
          %s150 = ssub.s32 256, 256
          %151 = vsyncadd [#allocation8], %s150
          %s152 = sshll.u32 [#allocation7], 4
          %s153 = int_to_ptr.vmem [resolvable:$true] %s152
          %158 = dma.hbm_to_vmem [thread:$0]  %s2, 256, %s153, [#allocation8], 64, 64, 4
        $region16: #{tpu_custom_call.1} parent=11 // pred_fallthru
          _
        // Predicated region
        $region17: #{tpu_custom_call.1} parent=11 // pred_check
          %p159 = pneg %p103
        $region18: #{tpu_custom_call.1} parent=11 // pred_check_branch
          %161 = sbr.rel (%p159) target = $region20
        $region19: #{tpu_custom_call.1} parent=11 // pred_region
          _
        $region20: #{tpu_custom_call.1} parent=11 // pred_fallthru
          _
      $region12: #{tpu_custom_call.1} parent=5 // pred_fallthru
        _
      %p162 = scmp.lt.s32.totalorder %s21, 2
      // Predicated region
      $region21: #{tpu_custom_call.1} parent=5 // pred_check
        %p163 = pneg %p162
      $region22: #{tpu_custom_call.1} parent=5 // pred_check_branch
        %165 = sbr.rel (%p163) target = $region24
      $region23: #{tpu_custom_call.1} parent=5 // pred_region
        // Predicated region
        $region25: #{tpu_custom_call.1} parent=23 // pred_check
          %p166 = pneg %p55
        $region26: #{tpu_custom_call.1} parent=23 // pred_check_branch
          %168 = sbr.rel (%p166) target = $region28
        $region27: #{tpu_custom_call.1} parent=23 // pred_region
          %s169 = sand.u32 %s45, 1
          %s170 = scalar_lea.sflag [#allocation5], %s169
          %s171 = sand.u32 %s45, 1
          %s172 = smul.addr %s171, 8
          %s173 = scalar_lea.vmem [#allocation4], %s172
          %s175 = ssub.s32 128, 128
          %176 = vsyncadd %s170, %s175
          %s177 = sadd.s32 %s29, %s28
          %s178 = smul.addr %s177, 128
          %s179 = scalar_lea.hbm %s1, %s178
          %s181 = sshll.u32 %s173, 4
          %s182 = int_to_ptr.vmem [resolvable:$true] %s181
          %184 = dma.hbm_to_vmem [thread:$0]  %s179, 128, %s182, %s170
        $region28: #{tpu_custom_call.1} parent=23 // pred_fallthru
          _
      $region24: #{tpu_custom_call.1} parent=5 // pred_fallthru
        _
      %p185 = scmp.le.s32.totalorder 1, %s21
      %p186 = scmp.lt.s32.totalorder %s21, 3
      %p187 = pnand %p185, %p186
      %p188 = pneg %p187
      // Predicated region
      $region29: #{tpu_custom_call.1} parent=5 // pred_check
        _
      $region30: #{tpu_custom_call.1} parent=5 // pred_check_branch
        %190 = sbr.rel (%p187) target = $region32
      $region31: #{tpu_custom_call.1} parent=5 // pred_region
        %s191 = ssub.s32 %s21, 1
        %s192 = sand.u32 %s48, 1
        %s193 = scalar_lea.sflag [#allocation5], %s192
        %s194 = sand.u32 %s48, 1
        %s195 = smul.addr %s194, 8
        %s196 = scalar_lea.vmem [#allocation4], %s195
        // Predicated region
        $region33: #{tpu_custom_call.1} parent=31 // pred_check
          %p197 = pneg %p61
        $region34: #{tpu_custom_call.1} parent=31 // pred_check_branch
          %199 = sbr.rel (%p197) target = $region36
        $region35: #{tpu_custom_call.1} parent=31 // pred_region
          %200 = dma.done %s193, 128
        $region36: #{tpu_custom_call.1} parent=31 // pred_fallthru
          _
        // Predicated region
        $region37: #{tpu_custom_call.1} parent=31 // pred_check
          %p201 = pneg %p82
        $region38: #{tpu_custom_call.1} parent=31 // pred_check_branch
          %203 = sbr.rel (%p201) target = $region40
        $region39: #{tpu_custom_call.1} parent=31 // pred_region
          %204 = dma.done [#allocation8], 256
        $region40: #{tpu_custom_call.1} parent=31 // pred_fallthru
          _
        %s205 = sand.u32 %s48, 1
        %s206 = scalar_lea.sflag [#allocation5], %s205
        %s207 = sand.u32 %s48, 1
        %s208 = smul.addr %s207, 8
        %s209 = scalar_lea.vmem [#allocation4], %s208
        %p210 = pneg %p61
        %p211 = pneg %p58
        %p212 = pneg %p82
        %p213 = pneg %p79
        %p214 = pneg %p103
        %p215 = pneg %p100
        %p216 = pneg %p131
        %p217 = pneg %p128
        %s218 = sand.u32 %s118, 1
        %s219 = scalar_lea.sflag [#allocation6], %s218
        %s220 = sand.u32 %s118, 1
        %s221 = smul.addr %s220, 4
        %s222 = scalar_lea.vmem [#allocation9], %s221
        %v224 = vld [vmem:[%s196] sm:$0xff]
        %v225 = vpack.c.bf16 %v224, %v224
        %v226 = vld [vmem:[#allocation7] sm:$0xf]
        %v227 = vld [vmem:[#allocation7 + $0x4] sm:$0xf]
        %v228 = vld [vmem:[#allocation7 + $0x8] sm:$0xf]
        %v229 = vld [vmem:[#allocation7 + $0xc] sm:$0xf]
        %v230 = vld [vmem:[%s3] sm:$0x1]
        %v232 = vlaneseq
        %v233 = vshrl.u32 %v232, 7
        %v234 = vsub.s32 0, %v233
        %v235 = vrot.slane %v230, %v234
        %v241 = vunpack.c.l.b16 %v226
        %v242 = vunpack.c.l.b16 %v227
        %v243 = vunpack.c.l.b16 %v228
        %v244 = vunpack.c.l.b16 %v229
        %v245 = vpack.c.b16 %v242, %v241
        %v246 = vpack.c.b16 %v244, %v243
        %vm249 = vcmask 261120
        %v251 = vsel %vm249, %v225, 0
        %253 = vmatprep.subr.bf16.mxu0 0
        %254 = vmatpush1.bf16.msra.mxu0 %v245
        %255 = vmatprep.subr.bf16.mxu0 0
        %256 = vmatpush1.bf16.msra.mxu0 %v246
        %257 = vmatprep.subr.bf16.mxu0 0
        %258 = vmatpush1.bf16.msra.mxu0 0
        %259 = vmatprep.subr.bf16.mxu0 0
        %260 = vmatpush1.bf16.msra.mxu0 0
        %261 = vmatprep.subr.bf16.mxu0 0
        %262 = vmatpush1.bf16.msra.mxu0 0
        %263 = vmatprep.subr.bf16.mxu0 0
        %264 = vmatpush1.bf16.msra.mxu0 0
        %265 = vmatprep.subr.bf16.mxu0 0
        %266 = vmatpush1.bf16.msra.mxu0 0
        %267 = vmatprep.subr.bf16.mxu0 0
        %268 = vmatpush1.bf16.msra.mxu0 0
        %269 = vmatprep.subr.bf16.mxu0 0
        %270 = vmatpush1.bf16.msra.mxu0 0
        %271 = vmatprep.subr.bf16.mxu0 0
        %272 = vmatpush1.bf16.msra.mxu0 0
        %273 = vmatprep.subr.bf16.mxu0 0
        %274 = vmatpush1.bf16.msra.mxu0 0
        %275 = vmatprep.subr.bf16.mxu0 0
        %276 = vmatpush1.bf16.msra.mxu0 0
        %277 = vmatprep.subr.bf16.mxu0 0
        %278 = vmatpush1.bf16.msra.mxu0 0
        %279 = vmatprep.subr.bf16.mxu0 0
        %280 = vmatpush1.bf16.msra.mxu0 0
        %281 = vmatprep.subr.bf16.mxu0 0
        %282 = vmatpush1.bf16.msra.mxu0 0
        %283 = vmatprep.subr.bf16.mxu0 0
        %284 = vmatpush1.bf16.msra.mxu0 0
        %285 = vmatprep.mubr.bf16.mxu0 0
        %286 = vmatmul.mubr.bf16.gmra.mrb[0].mxu0 %v251
        %v287 = vpop.f32.mrb[0].mxu0
        %v288 = vadd.f32 %v235, %v287
        %v289 = vpop.f32.mrb[0].mxu0
        %v290 = vpop.f32.mrb[0].mxu0
        %v291 = vpop.f32.mrb[0].mxu0
        %292 = vdwg.mxu0
        %v293 = vlaneseq
        %v294 = vshrl.u32 %v293, 7
        %s295 = smul.u32 %s31, 8
        %v296 = vstv %s295
        %v297 = vadd.s32 %v296, %v294
        %s298 = sld [smem:[#allocation3 + %s30]]
        %v299 = vstv %s298
        %vm300 = vcmp.lt.s32.totalorder %v297, %v299
        %v301 = vsel %vm300, 1, 0
        %vm302 = vcmp.eq.s32.totalorder %v301, 1
        %v303 = vsel %vm302, %v288, 0.0
        %v304 = vpack.c.bf16 %v303, %v303
        %vm305 = vcmask 257024
        %306 = vst.msk [vmem:[%s222] sm:$0xf] %vm305, %v304
        %s307 = sand.u32 %s118, 1
        %s308 = scalar_lea.sflag [#allocation6], %s307
        %s309 = sand.u32 %s118, 1
        %s310 = smul.addr %s309, 4
        %s311 = scalar_lea.vmem [#allocation9], %s310
        // Predicated region
        $region41: #{tpu_custom_call.1} parent=31 // pred_check
          %p312 = pneg %p128
        $region42: #{tpu_custom_call.1} parent=31 // pred_check_branch
          %314 = sbr.rel (%p312) target = $region44
        $region43: #{tpu_custom_call.1} parent=31 // pred_region
          %s316 = ssub.s32 64, 64
          %317 = vsyncadd %s308, %s316
          %s318 = sadd.s32 %s31, %s30
          %s319 = smul.addr %s318, 64
          %s320 = scalar_lea.hbm %s4, %s319
          %s322 = sshll.u32 %s311, 4
          %s323 = int_to_ptr.vmem [resolvable:$true] %s322
          %325 = dma.vmem_to_hbm [thread:$0]  %s323, 64, %s320, %s308
        $region44: #{tpu_custom_call.1} parent=31 // pred_fallthru
          _
      $region32: #{tpu_custom_call.1} parent=5 // pred_fallthru
        _
      %p326 = scmp.le.s32.totalorder 2, %s21
      // Predicated region
      $region45: #{tpu_custom_call.1} parent=5 // pred_check
        %p327 = pneg %p326
      $region46: #{tpu_custom_call.1} parent=5 // pred_check_branch
        %329 = sbr.rel (%p327) target = $region48
      $region47: #{tpu_custom_call.1} parent=5 // pred_region
        %s330 = ssub.s32 %s21, 2
        // Predicated region
        $region49: #{tpu_custom_call.1} parent=47 // pred_check
          %p331 = pneg %p134
        $region50: #{tpu_custom_call.1} parent=47 // pred_check_branch
          %333 = sbr.rel (%p331) target = $region52
        $region51: #{tpu_custom_call.1} parent=47 // pred_region
          %s334 = sand.u32 %s119, 1
          %s335 = scalar_lea.sflag [#allocation6], %s334
          %s336 = sand.u32 %s119, 1
          %s337 = smul.addr %s336, 4
          %s338 = scalar_lea.vmem [#allocation9], %s337
          %339 = dma.done %s335, 64
        $region52: #{tpu_custom_call.1} parent=47 // pred_fallthru
          _
      $region48: #{tpu_custom_call.1} parent=5 // pred_fallthru
        _
    $region6: #{tpu_custom_call.1} parent=1 // loop_footer
      %s25 = sadd.s32 1, %s21
    $region7: #{tpu_custom_call.1} parent=1 // loop_footer_branch
      %20 = sbr.rel target = $region3
    $region8: #{tpu_custom_call.1} parent=1 // loop_exit
      _
    %340 = vsyncpa [#allocation5], 1
    %s341 = scalar_lea.sflag [#allocation5], 1
    %342 = vsyncpa %s341, 1
    %343 = vsyncpa [#allocation8], 1
    %344 = vsyncpa [#allocation6], 1
    %s345 = scalar_lea.sflag [#allocation6], 1
    %346 = vsyncpa %s345, 1

</llo_original>
